<compile_context>
chip_gen: v6e
topology: v6e:2x2x1
jax: 0.10.0
libtpu: 0.0.40
codegen_flags: <defaults>
</compile_context>

<pallas_src>
import jax
import jax.numpy as jnp
from jax.experimental import pallas as pl
from jax.experimental.pallas import tpu as pltpu


def _copy_kernel(x_ref, o_ref):
    # Identity: copy the current VMEM tile from input to output.
    o_ref[...] = x_ref[...]


def _sublane_multiple(dtype):
    # f32 -> 8, bf16 -> 16, int8/fp8 -> 32 (keeps vregs fully packed).
    itemsize = jnp.dtype(dtype).itemsize
    return 8 * max(1, 4 // itemsize)


def _choose_cols(n):
    # Largest lane-dense width (multiple of 128) that evenly divides the
    # flattened element count; None if no such width exists.
    for cols in (8192, 4096, 2048, 1024, 512, 256, 128):
        if n % cols == 0:
            return cols
    return None


# ~8 MiB blocks: with 2 input + 2 output double buffers that is 32 MiB, which
# fits under the explicit 48 MiB scoped-VMEM limit on every generation
# (v5e/v6e: 128 MiB physical; v7x: 64 MiB physical).
_TARGET_BLOCK_BYTES = 8 * 1024 * 1024
_VMEM_LIMIT_BYTES = 48 << 20


def _small_copy(x2d):
    """Single full-array block copy — only for tiny arrays (< 1 vreg row)."""
    return pl.pallas_call(
        _copy_kernel,
        out_shape=jax.ShapeDtypeStruct(x2d.shape, x2d.dtype),
        grid=(1,),
        in_specs=[pl.BlockSpec(x2d.shape, lambda i: (0, 0))],
        out_specs=pl.BlockSpec(x2d.shape, lambda i: (0, 0)),
        compiler_params=pltpu.CompilerParams(
            dimension_semantics=("arbitrary",),
        ),
    )(x2d)


def _tiled_copy_2d(x2d):
    """Row-tiled, pipelined identity copy of a lane-dense (rows, cols) slab."""
    rows, cols = x2d.shape
    itemsize = jnp.dtype(x2d.dtype).itemsize
    sub = _sublane_multiple(x2d.dtype)

    tr = max(1, _TARGET_BLOCK_BYTES // (cols * itemsize))
    tr = max(sub, (tr // sub) * sub)  # dtype-aware sublane multiple
    if rows > sub:
        # Guarantee >= 2 grid steps so the read DMA of block i+1 overlaps the
        # write DMA of block i (up to ~2x effective bandwidth for mid-size
        # arrays that previously collapsed to a single block).
        half = max(sub, ((rows // 2) // sub) * sub)
        tr = min(tr, half)
    else:
        tr = rows  # full-dim block (exempt from the (8,128) rule)

    grid = (pl.cdiv(rows, tr),)
    return pl.pallas_call(
        _copy_kernel,
        out_shape=jax.ShapeDtypeStruct((rows, cols), x2d.dtype),
        grid=grid,
        in_specs=[pl.BlockSpec((tr, cols), lambda i: (i, 0))],
        out_specs=pl.BlockSpec((tr, cols), lambda i: (i, 0)),
        compiler_params=pltpu.CompilerParams(
            dimension_semantics=("parallel",),  # megacore sharding on v7x
            vmem_limit_bytes=_VMEM_LIMIT_BYTES,
        ),
    )(x2d)


def nonorm(x: jax.Array) -> jax.Array:
    """Production NoNorm forward: pure identity — no kernel, no HBM traffic."""
    return x


@jax.jit
def nonorm_pallas(x: jax.Array) -> jax.Array:
    """NoNorm as an explicit (tiled, pipelined) Pallas copy kernel."""
    orig_shape = x.shape
    n = x.size
    if n == 0:
        return x

    cols = _choose_cols(n)
    if cols is not None:
        out = _tiled_copy_2d(x.reshape(n // cols, cols))
        return out.reshape(orig_shape)

    # Element count not a multiple of 128: route the largest 128-divisible
    # prefix through the normal tiled path and copy only the (<128-element)
    # remainder through a tiny single full-array block.
    flat = x.reshape(n)
    n_main = (n // 128) * 128
    parts = []
    if n_main:
        cols_m = _choose_cols(n_main)
        main = _tiled_copy_2d(flat[:n_main].reshape(n_main // cols_m, cols_m))
        parts.append(main.reshape(n_main))
    tail = n - n_main
    if tail:
        t = _small_copy(flat[n_main:].reshape(1, tail))
        parts.append(t.reshape(tail))
    return jnp.concatenate(parts).reshape(orig_shape)


if __name__ == "__main__":
    key = jax.random.PRNGKey(0)
    # NCHW input, small shapes: batch=2, channels=4, spatial=16x16.
    x = jax.random.normal(key, (2, 4, 16, 16), dtype=jnp.float32)

    # Production path: identity short-circuit (the recommended real fix).
    y_fast = nonorm(x)
    assert y_fast is x

    # Pallas path: run the optimized copy kernel and verify.
    y = jax.block_until_ready(nonorm_pallas(x))
    assert y.shape == x.shape and y.dtype == x.dtype
    assert bool(jnp.all(y == x))

    # Also exercise the non-128-divisible fallback path (prefix + remainder).
    key2 = jax.random.PRNGKey(0)
    x_odd = jax.random.normal(key2, (7, 19), dtype=jnp.float32)  # 133 elems
    y_odd = jax.block_until_ready(nonorm_pallas(x_odd))
    assert y_odd.shape == x_odd.shape and y_odd.dtype == x_odd.dtype
    assert bool(jnp.all(y_odd == x_odd))

    print("KERNEL_OK")
</pallas_src>

<mosaic_0001>
module attributes {stable_mosaic.version = 11 : i64} {
  func.func @_copy_kernel(%arg0: i32, %arg1: memref<1x2048xf32, #tpu.memory_space<vmem>>, %arg2: memref<1x2048xf32, #tpu.memory_space<vmem>>) attributes {dimension_semantics = [#tpu.dimension_semantics<parallel>], iteration_bounds = array<i64: 1>, scalar_prefetch = 0 : i64, scratch_operands = 0 : i64, tpu.core_type = #tpu.core_type<tc>, window_params = [{transform_indices = @transform_0, window_bounds = array<i64: 1, 2048>}, {transform_indices = @transform_1, window_bounds = array<i64: 1, 2048>}]} {
    %c0 = arith.constant 0 : index
    %c0_0 = arith.constant 0 : index
    %0 = vector.load %arg1[%c0, %c0_0] : memref<1x2048xf32, #tpu.memory_space<vmem>>, vector<1x2048xf32>
    %c0_1 = arith.constant 0 : index
    %c0_2 = arith.constant 0 : index
    %1 = vector.load %arg2[%c0_1, %c0_2] : memref<1x2048xf32, #tpu.memory_space<vmem>>, vector<1x2048xf32>
    tpu.vector_store %arg2[%c0_1, %c0_2], %0 {strides = array<i32>} : memref<1x2048xf32, #tpu.memory_space<vmem>>, vector<1x2048xf32>,
    return
  }
  func.func @transform_0(%arg0: i32) -> (i32, i32) {
    %c0_i32 = arith.constant 0 : i32
    %c0_i32_0 = arith.constant 0 : i32
    return %arg0, %c0_i32 : i32, i32
  }
  func.func @transform_1(%arg0: i32) -> (i32, i32) {
    %c0_i32 = arith.constant 0 : i32
    %c0_i32_0 = arith.constant 0 : i32
    return %arg0, %c0_i32 : i32, i32
  }
}

</mosaic_0001>

<llo_original>
// kernel: nonorm_pallas.1
$region0: #{nonorm_pallas.1}
  #allocation0 [shape = 'u32[]', space=smem, size = 0x4, offset = 0x4, fixed_abs, tag = 'smem constant byte address 0x4 - core index']
  #allocation1 [shape = 'u32[144,128]{1,0:T(1,128)}', space=vmem, size = 0x12000, scoped, tag = 'internal scratch']
  %s0 = inlined_call_operand.vmem [shape: f32[1,2048], index: 0, kind: input, shape index: {}]
  %s1 = inlined_call_operand.vmem [shape: f32[1,2048], index: 1, kind: output, shape index: {}]
  %s2 = sld [smem:[#allocation0]]
  $region14: #{nonorm_pallas.1} parent=0
    _
  %s4 = ssub.s32 1, %s2
  %s5 = scalar_select 0, %s4, %s2
  // Predicated region
  $region2: #{nonorm_pallas.1} parent=0 // pred_check
    _
  $region3: #{nonorm_pallas.1} parent=0 // pred_check_branch
    %7 = sbr.rel (0) target = $region5
  $region4: #{nonorm_pallas.1} parent=0 // pred_region
    _
  $region5: #{nonorm_pallas.1} parent=0 // pred_fallthru
    _
  %v8 = vld [vmem:[%s0] sm:$0xff]
  %v9 = vld [vmem:[%s0 + $0x8] sm:$0xff]
  %10 = vst [vmem:[%s1] sm:$0xff] %v8
  %11 = vst [vmem:[%s1 + $0x8] sm:$0xff] %v9
  // Predicated region
  $region6: #{nonorm_pallas.1} parent=0 // pred_check
    _
  $region7: #{nonorm_pallas.1} parent=0 // pred_check_branch
    %13 = sbr.rel (0) target = $region9
  $region8: #{nonorm_pallas.1} parent=0 // pred_region
    _
  $region9: #{nonorm_pallas.1} parent=0 // pred_fallthru
    _
  // Predicated region
  $region10: #{nonorm_pallas.1} parent=0 // pred_check
    _
  $region11: #{nonorm_pallas.1} parent=0 // pred_check_branch
    %15 = sbr.rel (0) target = $region13
  $region12: #{nonorm_pallas.1} parent=0 // pred_region
    _
  $region13: #{nonorm_pallas.1} parent=0 // pred_fallthru
    _

</llo_original>
